<compile_context>
chip_gen: v7x
topology: tpu7x:2x2x1
jax: 0.10.0
libtpu: 0.0.40
codegen_flags: <defaults>
</compile_context>

<pallas_src>
import numpy as np
import jax
import jax.numpy as jnp
from jax.experimental import pallas as pl
from jax.experimental.pallas import tpu as pltpu


_BINOMIAL = {
    1: [1.0],
    2: [1.0, 1.0],
    3: [1.0, 2.0, 1.0],
    4: [1.0, 3.0, 3.0, 1.0],
    5: [1.0, 4.0, 6.0, 4.0, 1.0],
    6: [1.0, 5.0, 10.0, 10.0, 5.0, 1.0],
    7: [1.0, 6.0, 15.0, 20.0, 15.0, 6.0, 1.0],
}


def _filter_1d(filt_size):
    """Normalized 1D binomial taps as Python floats (baked into the kernel)."""
    a = np.asarray(_BINOMIAL[filt_size], dtype=np.float64)
    a = a / a.sum()
    return [float(v) for v in a]


def _filter_2d(filt_size):
    """2D filter (outer product), kept only for the reference check."""
    a = np.asarray(_BINOMIAL[filt_size], dtype=np.float64)
    f = a[:, None] * a[None, :]
    f = f / f.sum()
    return jnp.asarray(f, dtype=jnp.float32)


def _lane_tile(nc):
    """Pick a lane-dim tile that divides N*C (128 when possible)."""
    return 128 if (nc % 128 == 0) else nc


def _make_blur_kernel(taps, stride, pads, pad_mode, h, w):
    """Build the per-block kernel. Block layout: (H, W, C_tile), C in lanes."""
    k = len(taps)
    pad_l, pad_r, pad_t, pad_b = pads
    hp = h + pad_t + pad_b
    wp = w + pad_l + pad_r
    ho = (hp - k) // stride + 1          # output rows
    hv = hp - k + 1                      # unstrided vertical-conv rows
    wv = wp - k + 1                      # unstrided horizontal-conv cols

    def _pad_axis(x, axis, p_lo, p_hi):
        """Pad along axis 0 (H) or 1 (W) with static unit-stride slices."""
        n = x.shape[axis]

        def take(idx):
            if axis == 0:
                return x[idx:idx + 1]
            return x[:, idx:idx + 1]

        if pad_mode == "reflect":
            lo = [take(p_lo - j) for j in range(p_lo)]        # x[p], ..., x[1]
            hi = [take(n - 2 - j) for j in range(p_hi)]       # x[n-2], ...
        elif pad_mode == "edge":
            lo = [take(0)] * p_lo
            hi = [take(n - 1)] * p_hi
        else:  # zero padding
            zshape = list(x.shape)
            zshape[axis] = 1
            z = jnp.zeros(zshape, x.dtype)
            lo = [z] * p_lo
            hi = [z] * p_hi

        parts = lo + [x] + hi
        if len(parts) == 1:
            return x
        return jnp.concatenate(parts, axis=axis)

    def kernel(x_ref, o_ref):
        # x_ref: (H, W, CT) block with channels in the lane dimension.
        x = x_ref[...].astype(jnp.float32)

        # ---- fused spatial padding (no HBM round-trip for the pad) ----
        xp = _pad_axis(x, 0, pad_t, pad_b)      # (Hp, W,  CT)
        xp = _pad_axis(xp, 1, pad_l, pad_r)     # (Hp, Wp, CT)

        # ---- separable vertical pass: k taps, unit-stride leading slices ----
        u = taps[0] * xp[0:hv]
        for kh in range(1, k):
            u = u + taps[kh] * xp[kh:kh + hv]   # (Hv, Wp, CT) f32

        # ---- stride-s row down-select via leading-dim reshape ----
        if stride > 1:
            extra = ho * stride - hv            # in [0, stride-1]
            if extra > 0:
                u = jnp.concatenate(
                    [u, jnp.zeros((extra,) + u.shape[1:], u.dtype)], axis=0)
            u = u.reshape(ho, stride, wp, u.shape[-1])[:, 0]
        # u: (Ho, Wp, CT)

        # ---- separable horizontal pass at full width (unit-stride slices) ---
        # The stride-s column down-select is done in the wrapper, fused by XLA
        # with the layout transpose back to NCHW.
        acc = taps[0] * u[:, 0:wv, :]
        for kw in range(1, k):
            acc = acc + taps[kw] * u[:, kw:kw + wv, :]

        o_ref[...] = acc.astype(o_ref.dtype)    # lane-dense store

    return kernel, (hp, wp, ho, hv, wv)


class Downsample:
    """JAX/Pallas port of the anti-aliased BlurPool Downsample module."""

    def __init__(self, pad_type="reflect", filt_size=3, stride=2,
                 channels=None, pad_off=0):
        self.filt_size = filt_size
        self.pad_off = pad_off
        self.pad_sizes = [
            int(1.0 * (filt_size - 1) / 2),
            int(np.ceil(1.0 * (filt_size - 1) / 2)),
            int(1.0 * (filt_size - 1) / 2),
            int(np.ceil(1.0 * (filt_size - 1) / 2)),
        ]
        self.pad_sizes = [p + pad_off for p in self.pad_sizes]  # (l, r, t, b)
        self.stride = stride
        self.channels = channels
        if pad_type in ("refl", "reflect"):
            self.pad_mode = "reflect"
        elif pad_type in ("repl", "replicate"):
            self.pad_mode = "edge"
        elif pad_type == "zero":
            self.pad_mode = "constant"
        else:
            raise ValueError(f"Pad type [{pad_type}] not recognized")
        self.taps = _filter_1d(filt_size) if filt_size >= 1 else None
        self.filt = _filter_2d(filt_size) if filt_size >= 1 else None

    def _pad_xla(self, x):
        left, right, top, bot = self.pad_sizes
        return jnp.pad(x, ((0, 0), (0, 0), (top, bot), (left, right)),
                       mode=self.pad_mode)

    def __call__(self, x):
        N, C, H, W = x.shape
        s = self.stride

        if self.filt_size == 1:
            # Pure strided subsampling; no conv hot path worth a kernel.
            if self.pad_off == 0:
                return x[:, :, ::s, ::s]
            return self._pad_xla(x)[:, :, ::s, ::s]

        pad_l, pad_r, pad_t, pad_b = self.pad_sizes
        k = self.filt_size
        NC = N * C

        # Channels-last with batch folded into lanes: (H, W, N*C).
        xt = jnp.transpose(x, (2, 3, 0, 1)).reshape(H, W, NC)

        kernel, (hp, wp, ho, hv, wv) = _make_blur_kernel(
            self.taps, s, (pad_l, pad_r, pad_t, pad_b), self.pad_mode, H, W)
        wo = (wp - k) // s + 1

        ct = _lane_tile(NC)
        assert NC % ct == 0
        grid = (NC // ct,)

        itemsize = xt.dtype.itemsize
        cost = pl.CostEstimate(
            flops=2 * k * (hv * wp + ho * wv) * NC,
            transcendentals=0,
            bytes_accessed=H * W * NC * itemsize + ho * wv * NC * itemsize,
        )

        out_full = pl.pallas_call(
            kernel,
            out_shape=jax.ShapeDtypeStruct((ho, wv, NC), x.dtype),
            grid_spec=pltpu.PrefetchScalarGridSpec(
                num_scalar_prefetch=0,
                grid=grid,
                in_specs=[pl.BlockSpec((H, W, ct), lambda i: (0, 0, i))],
                out_specs=pl.BlockSpec((ho, wv, ct), lambda i: (0, 0, i)),
            ),
            compiler_params=pltpu.CompilerParams(
                dimension_semantics=("parallel",),
                vmem_limit_bytes=64 * 1024 * 1024,
            ),
            cost_estimate=cost,
        )(xt)

        # Stride-s column down-select + back to NCHW (one fused XLA pass over
        # the small output).
        out = out_full[:, 0:(wo - 1) * s + 1:s, :]
        out = out.reshape(ho, wo, N, C).transpose(2, 3, 0, 1)
        return out


def _reference(x, filt2d, stride, pad_sizes, pad_mode):
    """Exact f32 shift-and-add reference (matches F.conv2d + pad semantics)."""
    left, right, top, bot = pad_sizes
    xp = jnp.pad(x, ((0, 0), (0, 0), (top, bot), (left, right)), mode=pad_mode)
    k = filt2d.shape[0]
    Hp, Wp = xp.shape[2], xp.shape[3]
    Ho = (Hp - k) // stride + 1
    Wo = (Wp - k) // stride + 1
    out = jnp.zeros(x.shape[:2] + (Ho, Wo), jnp.float32)
    for i in range(k):
        for j in range(k):
            patch = xp[:, :, i:i + (Ho - 1) * stride + 1:stride,
                             j:j + (Wo - 1) * stride + 1:stride]
            out = out + filt2d[i, j] * patch.astype(jnp.float32)
    return out.astype(x.dtype)


if __name__ == "__main__":
    key = jax.random.PRNGKey(0)

    # --- main config: reflect pad, 3x3 filter, stride 2 ---
    N, C, H, W = 2, 4, 16, 16
    x = jax.random.normal(key, (N, C, H, W), dtype=jnp.float32)
    ds = Downsample(pad_type="reflect", filt_size=3, stride=2, channels=C)
    out = jax.block_until_ready(ds(x))
    assert out.shape == (N, C, 8, 8), out.shape
    ref = _reference(x, ds.filt, ds.stride, ds.pad_sizes, ds.pad_mode)
    np.testing.assert_allclose(np.asarray(out), np.asarray(ref),
                               rtol=1e-5, atol=1e-5)

    # --- replicate pad, 5-tap filter, non-square image ---
    x2 = jax.random.normal(jax.random.PRNGKey(1), (1, 3, 12, 16),
                           dtype=jnp.float32)
    ds2 = Downsample(pad_type="replicate", filt_size=5, stride=2, channels=3)
    out2 = jax.block_until_ready(ds2(x2))
    assert out2.shape == (1, 3, 6, 8), out2.shape
    ref2 = _reference(x2, ds2.filt, ds2.stride, ds2.pad_sizes, ds2.pad_mode)
    np.testing.assert_allclose(np.asarray(out2), np.asarray(ref2),
                               rtol=1e-5, atol=1e-5)

    # --- zero pad, even (4-tap... here 2-tap) filter ---
    x3 = jax.random.normal(jax.random.PRNGKey(2), (2, 2, 8, 8),
                           dtype=jnp.float32)
    ds3 = Downsample(pad_type="zero", filt_size=2, stride=2, channels=2)
    out3 = jax.block_until_ready(ds3(x3))
    assert out3.shape == (2, 2, 4, 4), out3.shape
    ref3 = _reference(x3, ds3.filt, ds3.stride, ds3.pad_sizes, ds3.pad_mode)
    np.testing.assert_allclose(np.asarray(out3), np.asarray(ref3),
                               rtol=1e-5, atol=1e-5)

    # --- filt_size == 1 path (pure strided subsample) ---
    ds1 = Downsample(pad_type="reflect", filt_size=1, stride=2, channels=C)
    out1 = jax.block_until_ready(ds1(x))
    np.testing.assert_allclose(np.asarray(out1),
                               np.asarray(x[:, :, ::2, ::2]))

    print("KERNEL_OK")
</pallas_src>

<mosaic_0001>
module attributes {stable_mosaic.version = 11 : i64} {
  func.func @kernel(%arg0: i32, %arg1: memref<16x16x8xf32, #tpu.memory_space<vmem>>, %arg2: memref<8x16x8xf32, #tpu.memory_space<vmem>>) attributes {dimension_semantics = [#tpu.dimension_semantics<parallel>], iteration_bounds = array<i64: 1>, scalar_prefetch = 0 : i64, scratch_operands = 0 : i64, tpu.core_type = #tpu.core_type<tc>, window_params = [{transform_indices = @transform_0, window_bounds = array<i64: 16, 16, 8>}, {transform_indices = @transform_1, window_bounds = array<i64: 8, 16, 8>}]} {
    %c0 = arith.constant 0 : index
    %c0_0 = arith.constant 0 : index
    %c0_1 = arith.constant 0 : index
    %0 = vector.load %arg1[%c0, %c0_0, %c0_1] : memref<16x16x8xf32, #tpu.memory_space<vmem>>, vector<16x16x8xf32>
    %1 = vector.extract_strided_slice %0 {offsets = [1, 0, 0], sizes = [1, 16, 8], strides = [1, 1, 1]} : vector<16x16x8xf32> to vector<1x16x8xf32>
    %2 = vector.extract_strided_slice %0 {offsets = [14, 0, 0], sizes = [1, 16, 8], strides = [1, 1, 1]} : vector<16x16x8xf32> to vector<1x16x8xf32>
    %3 = tpu.concatenate %1, %0, %2 in 0 : vector<1x16x8xf32>, vector<16x16x8xf32>, vector<1x16x8xf32> -> vector<18x16x8xf32>
    %4 = vector.extract_strided_slice %3 {offsets = [0, 1, 0], sizes = [18, 1, 8], strides = [1, 1, 1]} : vector<18x16x8xf32> to vector<18x1x8xf32>
    %5 = vector.extract_strided_slice %3 {offsets = [0, 14, 0], sizes = [18, 1, 8], strides = [1, 1, 1]} : vector<18x16x8xf32> to vector<18x1x8xf32>
    %6 = tpu.concatenate %4, %3, %5 in 1 : vector<18x1x8xf32>, vector<18x16x8xf32>, vector<18x1x8xf32> -> vector<18x18x8xf32>
    %7 = vector.extract_strided_slice %6 {offsets = [0, 0, 0], sizes = [16, 18, 8], strides = [1, 1, 1]} : vector<18x18x8xf32> to vector<16x18x8xf32>
    %cst = arith.constant 2.500000e-01 : f32
    %8 = vector.broadcast %cst : f32 to vector<16x18x8xf32>
    %9 = arith.mulf %8, %7 : vector<16x18x8xf32>
    %10 = vector.extract_strided_slice %6 {offsets = [1, 0, 0], sizes = [16, 18, 8], strides = [1, 1, 1]} : vector<18x18x8xf32> to vector<16x18x8xf32>
    %cst_2 = arith.constant 5.000000e-01 : f32
    %11 = vector.broadcast %cst_2 : f32 to vector<16x18x8xf32>
    %12 = arith.mulf %11, %10 : vector<16x18x8xf32>
    %13 = arith.addf %9, %12 : vector<16x18x8xf32>
    %14 = vector.extract_strided_slice %6 {offsets = [2, 0, 0], sizes = [16, 18, 8], strides = [1, 1, 1]} : vector<18x18x8xf32> to vector<16x18x8xf32>
    %cst_3 = arith.constant 2.500000e-01 : f32
    %15 = vector.broadcast %cst_3 : f32 to vector<16x18x8xf32>
    %16 = arith.mulf %15, %14 : vector<16x18x8xf32>
    %17 = arith.addf %13, %16 : vector<16x18x8xf32>
    %18 = vector.shape_cast %17 : vector<16x18x8xf32> to vector<8x2x18x8xf32>
    %19 = vector.extract_strided_slice %18 {offsets = [0, 0, 0, 0], sizes = [8, 1, 18, 8], strides = [1, 1, 1, 1]} : vector<8x2x18x8xf32> to vector<8x1x18x8xf32>
    %20 = vector.shape_cast %19 : vector<8x1x18x8xf32> to vector<8x18x8xf32>
    %21 = vector.extract_strided_slice %20 {offsets = [0, 0, 0], sizes = [8, 16, 8], strides = [1, 1, 1]} : vector<8x18x8xf32> to vector<8x16x8xf32>
    %cst_4 = arith.constant 2.500000e-01 : f32
    %22 = vector.broadcast %cst_4 : f32 to vector<8x16x8xf32>
    %23 = arith.mulf %22, %21 : vector<8x16x8xf32>
    %24 = vector.extract_strided_slice %20 {offsets = [0, 1, 0], sizes = [8, 16, 8], strides = [1, 1, 1]} : vector<8x18x8xf32> to vector<8x16x8xf32>
    %cst_5 = arith.constant 5.000000e-01 : f32
    %25 = vector.broadcast %cst_5 : f32 to vector<8x16x8xf32>
    %26 = arith.mulf %25, %24 : vector<8x16x8xf32>
    %27 = arith.addf %23, %26 : vector<8x16x8xf32>
    %28 = vector.extract_strided_slice %20 {offsets = [0, 2, 0], sizes = [8, 16, 8], strides = [1, 1, 1]} : vector<8x18x8xf32> to vector<8x16x8xf32>
    %cst_6 = arith.constant 2.500000e-01 : f32
    %29 = vector.broadcast %cst_6 : f32 to vector<8x16x8xf32>
    %30 = arith.mulf %29, %28 : vector<8x16x8xf32>
    %31 = arith.addf %27, %30 : vector<8x16x8xf32>
    %c0_7 = arith.constant 0 : index
    %c0_8 = arith.constant 0 : index
    %c0_9 = arith.constant 0 : index
    %32 = vector.load %arg2[%c0_7, %c0_8, %c0_9] : memref<8x16x8xf32, #tpu.memory_space<vmem>>, vector<8x16x8xf32>
    tpu.vector_store %arg2[%c0_7, %c0_8, %c0_9], %31 {strides = array<i32>} : memref<8x16x8xf32, #tpu.memory_space<vmem>>, vector<8x16x8xf32>,
    return
  }
  func.func @transform_0(%arg0: i32) -> (i32, i32, i32) {
    %c0_i32 = arith.constant 0 : i32
    %c0_i32_0 = arith.constant 0 : i32
    %c0_i32_1 = arith.constant 0 : i32
    return %c0_i32, %c0_i32_0, %arg0 : i32, i32, i32
  }
  func.func @transform_1(%arg0: i32) -> (i32, i32, i32) {
    %c0_i32 = arith.constant 0 : i32
    %c0_i32_0 = arith.constant 0 : i32
    %c0_i32_1 = arith.constant 0 : i32
    return %c0_i32, %c0_i32_0, %arg0 : i32, i32, i32
  }
}

</mosaic_0001>

<llo_original>
// kernel: tpu_custom_call.1
$region0: #{tpu_custom_call.1}
  #allocation0 [shape = 'u32[]', space=smem, size = 0x4, offset = 0x4, fixed_abs, tag = 'smem constant byte address 0x4 - core index']
  #allocation1 [shape = 'u32[144,128]{1,0:T(1,128)}', space=vmem, size = 0x12000, scoped, tag = 'internal scratch']
  %s0 = inlined_call_operand.hbm [shape: f32[16,16,8], index: 0, kind: input, shape index: {}]
  %s1 = inlined_call_operand.hbm [shape: f32[8,16,8], index: 1, kind: output, shape index: {}]
  %s2 = sld [smem:[#allocation0]]
  $region18: #{tpu_custom_call.1} parent=0
    _
  %s4 = ssub.s32 1, %s2
  %s5 = scalar_select 0, %s4, %s2
  $region1: #{tpu_custom_call.1} parent=0
    #allocation2 [shape = 'u8[131072]{0}', space=vmem, size = 0x20000, scoped, tag = 'input window, operand 0, single buffered']
    #allocation3 [shape = 's32[1]{0}', space=sflag, size = 0x4, scoped, tag = 'scoped memory for tpu_custom_call.1']
    #allocation4 [shape = 's32[1]{0}', space=sflag, size = 0x4, scoped, tag = 'scoped memory for tpu_custom_call.1']
    #allocation5 [shape = 'u8[65536]{0}', space=vmem, size = 0x10000, scoped, tag = 'output window, operand 0, single buffered']
    %6 = vsyncpa [#allocation3], 0
    %7 = vsyncpa [#allocation4], 0
    // Predicated region
    $region2: #{tpu_custom_call.1} parent=1 // pred_check
      _
    $region3: #{tpu_custom_call.1} parent=1 // pred_check_branch
      %9 = sbr.rel (0) target = $region5
    $region4: #{tpu_custom_call.1} parent=1 // pred_region
      %s11 = ssub.s32 4096, 4096
      %12 = vsyncadd [#allocation3], %s11
      %s13 = sshll.u32 [#allocation2], 4
      %s14 = int_to_ptr.vmem [resolvable:$true] %s13
      %19 = dma.hbm_to_vmem [thread:$0]  %s0, 4096, %s14, [#allocation3], 128, 128, 8
    $region5: #{tpu_custom_call.1} parent=1 // pred_fallthru
      _
    // Predicated region
    $region6: #{tpu_custom_call.1} parent=1 // pred_check
      _
    $region7: #{tpu_custom_call.1} parent=1 // pred_check_branch
      %21 = sbr.rel (0) target = $region9
    $region8: #{tpu_custom_call.1} parent=1 // pred_region
      %22 = dma.done [#allocation3], 4096
    $region9: #{tpu_custom_call.1} parent=1 // pred_fallthru
      _
    %v23 = vld [vmem:[#allocation2] sm:$0xff]
    %v24 = vld [vmem:[#allocation2 + $0x8] sm:$0xff]
    %v25 = vld [vmem:[#allocation2 + $0x10] sm:$0xff]
    %v26 = vld [vmem:[#allocation2 + $0x18] sm:$0xff]
    %v27 = vld [vmem:[#allocation2 + $0x20] sm:$0xff]
    %v28 = vld [vmem:[#allocation2 + $0x28] sm:$0xff]
    %v29 = vld [vmem:[#allocation2 + $0x30] sm:$0xff]
    %v30 = vld [vmem:[#allocation2 + $0x38] sm:$0xff]
    %v31 = vld [vmem:[#allocation2 + $0x40] sm:$0xff]
    %v32 = vld [vmem:[#allocation2 + $0x48] sm:$0xff]
    %v33 = vld [vmem:[#allocation2 + $0x50] sm:$0xff]
    %v34 = vld [vmem:[#allocation2 + $0x58] sm:$0xff]
    %v35 = vld [vmem:[#allocation2 + $0x60] sm:$0xff]
    %v36 = vld [vmem:[#allocation2 + $0x68] sm:$0xff]
    %v37 = vld [vmem:[#allocation2 + $0x70] sm:$0xff]
    %v38 = vld [vmem:[#allocation2 + $0x78] sm:$0xff]
    %v39 = vld [vmem:[#allocation2 + $0x80] sm:$0xff]
    %v40 = vld [vmem:[#allocation2 + $0x88] sm:$0xff]
    %v41 = vld [vmem:[#allocation2 + $0x90] sm:$0xff]
    %v42 = vld [vmem:[#allocation2 + $0x98] sm:$0xff]
    %v43 = vld [vmem:[#allocation2 + $0xa0] sm:$0xff]
    %v44 = vld [vmem:[#allocation2 + $0xa8] sm:$0xff]
    %v45 = vld [vmem:[#allocation2 + $0xb0] sm:$0xff]
    %v46 = vld [vmem:[#allocation2 + $0xb8] sm:$0xff]
    %v47 = vld [vmem:[#allocation2 + $0xc0] sm:$0xff]
    %v48 = vld [vmem:[#allocation2 + $0xc8] sm:$0xff]
    %v49 = vld [vmem:[#allocation2 + $0xd0] sm:$0xff]
    %v50 = vld [vmem:[#allocation2 + $0xd8] sm:$0xff]
    %v51 = vld [vmem:[#allocation2 + $0xe0] sm:$0xff]
    %v52 = vld [vmem:[#allocation2 + $0xe8] sm:$0xff]
    %v53 = vld [vmem:[#allocation2 + $0xf0] sm:$0xff]
    %v54 = vld [vmem:[#allocation2 + $0xf8] sm:$0xff]
    %v71 = vrot.slane %v25, 1
    %v72 = vrot.slane %v23, 1
    %v73 = vrot.slane %v27, 1
    %v74 = vrot.slane %v29, 1
    %v75 = vrot.slane %v31, 1
    %v76 = vrot.slane %v33, 1
    %v77 = vrot.slane %v35, 1
    %v78 = vrot.slane %v37, 1
    %v79 = vrot.slane %v39, 1
    %v80 = vrot.slane %v41, 1
    %v81 = vrot.slane %v43, 1
    %v82 = vrot.slane %v45, 1
    %v83 = vrot.slane %v47, 1
    %v84 = vrot.slane %v49, 1
    %v85 = vrot.slane %v51, 1
    %v86 = vrot.slane %v53, 1
    %vm119 = vcmask 1040384
    %v120 = vrot.slane %v25, 7
    %v121 = vrot.slane %v26, 7
    %v122 = vsel %vm119, %v120, %v121
    %v123 = vrot.slane %v23, 7
    %v124 = vrot.slane %v24, 7
    %v125 = vsel %vm119, %v123, %v124
    %v126 = vrot.slane %v27, 7
    %v127 = vrot.slane %v28, 7
    %v128 = vsel %vm119, %v126, %v127
    %v129 = vrot.slane %v29, 7
    %v130 = vrot.slane %v30, 7
    %v131 = vsel %vm119, %v129, %v130
    %v132 = vrot.slane %v31, 7
    %v133 = vrot.slane %v32, 7
    %v134 = vsel %vm119, %v132, %v133
    %v135 = vrot.slane %v33, 7
    %v136 = vrot.slane %v34, 7
    %v137 = vsel %vm119, %v135, %v136
    %v138 = vrot.slane %v35, 7
    %v139 = vrot.slane %v36, 7
    %v140 = vsel %vm119, %v138, %v139
    %v141 = vrot.slane %v37, 7
    %v142 = vrot.slane %v38, 7
    %v143 = vsel %vm119, %v141, %v142
    %v144 = vrot.slane %v39, 7
    %v145 = vrot.slane %v40, 7
    %v146 = vsel %vm119, %v144, %v145
    %v147 = vrot.slane %v41, 7
    %v148 = vrot.slane %v42, 7
    %v149 = vsel %vm119, %v147, %v148
    %v150 = vrot.slane %v43, 7
    %v151 = vrot.slane %v44, 7
    %v152 = vsel %vm119, %v150, %v151
    %v153 = vrot.slane %v45, 7
    %v154 = vrot.slane %v46, 7
    %v155 = vsel %vm119, %v153, %v154
    %v156 = vrot.slane %v47, 7
    %v157 = vrot.slane %v48, 7
    %v158 = vsel %vm119, %v156, %v157
    %v159 = vrot.slane %v49, 7
    %v160 = vrot.slane %v50, 7
    %v161 = vsel %vm119, %v159, %v160
    %v162 = vrot.slane %v51, 7
    %v163 = vrot.slane %v52, 7
    %v164 = vsel %vm119, %v162, %v163
    %v165 = vrot.slane %v53, 7
    %v166 = vrot.slane %v54, 7
    %v167 = vsel %vm119, %v165, %v166
    %v216 = vrot.slane %v26, 5
    %v217 = vrot.slane %v24, 5
    %v218 = vrot.slane %v28, 5
    %v219 = vrot.slane %v30, 5
    %v220 = vrot.slane %v32, 5
    %v221 = vrot.slane %v34, 5
    %v222 = vrot.slane %v36, 5
    %v223 = vrot.slane %v38, 5
    %v224 = vrot.slane %v40, 5
    %v225 = vrot.slane %v42, 5
    %v226 = vrot.slane %v44, 5
    %v227 = vrot.slane %v46, 5
    %v228 = vrot.slane %v48, 5
    %v229 = vrot.slane %v50, 5
    %v230 = vrot.slane %v52, 5
    %v231 = vrot.slane %v54, 5
    %v248 = vsel %vm119, %v71, %v120
    %v249 = vsel %vm119, %v72, %v123
    %v250 = vsel %vm119, %v73, %v126
    %v251 = vsel %vm119, %v74, %v129
    %v252 = vsel %vm119, %v75, %v132
    %v253 = vsel %vm119, %v76, %v135
    %v254 = vsel %vm119, %v77, %v138
    %v255 = vsel %vm119, %v78, %v141
    %v256 = vsel %vm119, %v79, %v144
    %v257 = vsel %vm119, %v80, %v147
    %v258 = vsel %vm119, %v81, %v150
    %v259 = vsel %vm119, %v82, %v153
    %v260 = vsel %vm119, %v83, %v156
    %v261 = vsel %vm119, %v84, %v159
    %v262 = vsel %vm119, %v85, %v162
    %v263 = vsel %vm119, %v86, %v165
    %v264 = vsel %vm119, %v121, %v216
    %v265 = vsel %vm119, %v124, %v217
    %v266 = vsel %vm119, %v127, %v218
    %v267 = vsel %vm119, %v130, %v219
    %v268 = vsel %vm119, %v133, %v220
    %v269 = vsel %vm119, %v136, %v221
    %v270 = vsel %vm119, %v139, %v222
    %v271 = vsel %vm119, %v142, %v223
    %v272 = vsel %vm119, %v145, %v224
    %v273 = vsel %vm119, %v148, %v225
    %v274 = vsel %vm119, %v151, %v226
    %v275 = vsel %vm119, %v154, %v227
    %v276 = vsel %vm119, %v157, %v228
    %v277 = vsel %vm119, %v160, %v229
    %v278 = vsel %vm119, %v163, %v230
    %v279 = vsel %vm119, %v166, %v231
    %v280 = vmul.f32 %v248, 0.25
    %v281 = vmul.f32 %v122, 0.25
    %v282 = vmul.f32 %v264, 0.25
    %v283 = vmul.f32 %v251, 0.25
    %v284 = vmul.f32 %v131, 0.25
    %v285 = vmul.f32 %v267, 0.25
    %v286 = vmul.f32 %v253, 0.25
    %v287 = vmul.f32 %v137, 0.25
    %v288 = vmul.f32 %v269, 0.25
    %v289 = vmul.f32 %v255, 0.25
    %v290 = vmul.f32 %v143, 0.25
    %v291 = vmul.f32 %v271, 0.25
    %v292 = vmul.f32 %v257, 0.25
    %v293 = vmul.f32 %v149, 0.25
    %v294 = vmul.f32 %v273, 0.25
    %v295 = vmul.f32 %v259, 0.25
    %v296 = vmul.f32 %v155, 0.25
    %v297 = vmul.f32 %v275, 0.25
    %v298 = vmul.f32 %v261, 0.25
    %v299 = vmul.f32 %v161, 0.25
    %v300 = vmul.f32 %v277, 0.25
    %v301 = vmul.f32 %v249, 0.5
    %v302 = vmul.f32 %v125, 0.5
    %v303 = vmul.f32 %v265, 0.5
    %v304 = vmul.f32 %v250, 0.5
    %v305 = vmul.f32 %v128, 0.5
    %v306 = vmul.f32 %v266, 0.5
    %v307 = vmul.f32 %v252, 0.5
    %v308 = vmul.f32 %v134, 0.5
    %v309 = vmul.f32 %v268, 0.5
    %v310 = vmul.f32 %v254, 0.5
    %v311 = vmul.f32 %v140, 0.5
    %v312 = vmul.f32 %v270, 0.5
    %v313 = vmul.f32 %v256, 0.5
    %v314 = vmul.f32 %v146, 0.5
    %v315 = vmul.f32 %v272, 0.5
    %v316 = vmul.f32 %v258, 0.5
    %v317 = vmul.f32 %v152, 0.5
    %v318 = vmul.f32 %v274, 0.5
    %v319 = vmul.f32 %v260, 0.5
    %v320 = vmul.f32 %v158, 0.5
    %v321 = vmul.f32 %v276, 0.5
    %v322 = vmul.f32 %v262, 0.5
    %v323 = vmul.f32 %v164, 0.5
    %v324 = vmul.f32 %v278, 0.5
    %v325 = vadd.f32 %v280, %v301
    %v326 = vadd.f32 %v281, %v302
    %v327 = vadd.f32 %v282, %v303
    %v328 = vadd.f32 %v280, %v304
    %v329 = vadd.f32 %v281, %v305
    %v330 = vadd.f32 %v282, %v306
    %v331 = vadd.f32 %v283, %v307
    %v332 = vadd.f32 %v284, %v308
    %v333 = vadd.f32 %v285, %v309
    %v334 = vadd.f32 %v286, %v310
    %v335 = vadd.f32 %v287, %v311
    %v336 = vadd.f32 %v288, %v312
    %v337 = vadd.f32 %v289, %v313
    %v338 = vadd.f32 %v290, %v314
    %v339 = vadd.f32 %v291, %v315
    %v340 = vadd.f32 %v292, %v316
    %v341 = vadd.f32 %v293, %v317
    %v342 = vadd.f32 %v294, %v318
    %v343 = vadd.f32 %v295, %v319
    %v344 = vadd.f32 %v296, %v320
    %v345 = vadd.f32 %v297, %v321
    %v346 = vadd.f32 %v298, %v322
    %v347 = vadd.f32 %v299, %v323
    %v348 = vadd.f32 %v300, %v324
    %v349 = vmul.f32 %v263, 0.25
    %v350 = vmul.f32 %v167, 0.25
    %v351 = vmul.f32 %v279, 0.25
    %v352 = vadd.f32 %v325, %v280
    %v353 = vadd.f32 %v326, %v281
    %v354 = vadd.f32 %v327, %v282
    %v355 = vadd.f32 %v328, %v283
    %v356 = vadd.f32 %v329, %v284
    %v357 = vadd.f32 %v330, %v285
    %v358 = vadd.f32 %v331, %v286
    %v359 = vadd.f32 %v332, %v287
    %v360 = vadd.f32 %v333, %v288
    %v361 = vadd.f32 %v334, %v289
    %v362 = vadd.f32 %v335, %v290
    %v363 = vadd.f32 %v336, %v291
    %v364 = vadd.f32 %v337, %v292
    %v365 = vadd.f32 %v338, %v293
    %v366 = vadd.f32 %v339, %v294
    %v367 = vadd.f32 %v340, %v295
    %v368 = vadd.f32 %v341, %v296
    %v369 = vadd.f32 %v342, %v297
    %v370 = vadd.f32 %v343, %v298
    %v371 = vadd.f32 %v344, %v299
    %v372 = vadd.f32 %v345, %v300
    %v373 = vadd.f32 %v346, %v349
    %v374 = vadd.f32 %v347, %v350
    %v375 = vadd.f32 %v348, %v351
    %v376 = vmul.f32 %v352, 0.25
    %v377 = vmul.f32 %v353, 0.25
    %v378 = vmul.f32 %v355, 0.25
    %v379 = vmul.f32 %v356, 0.25
    %v380 = vmul.f32 %v358, 0.25
    %v381 = vmul.f32 %v359, 0.25
    %v382 = vmul.f32 %v361, 0.25
    %v383 = vmul.f32 %v362, 0.25
    %v384 = vmul.f32 %v364, 0.25
    %v385 = vmul.f32 %v365, 0.25
    %v386 = vmul.f32 %v367, 0.25
    %v387 = vmul.f32 %v368, 0.25
    %v388 = vmul.f32 %v370, 0.25
    %v389 = vmul.f32 %v371, 0.25
    %v390 = vmul.f32 %v373, 0.25
    %v391 = vmul.f32 %v374, 0.25
    %v392 = vmul.f32 %v352, 0.5
    %v393 = vmul.f32 %v353, 0.5
    %v394 = vmul.f32 %v354, 0.5
    %v395 = vmul.f32 %v355, 0.5
    %v396 = vmul.f32 %v356, 0.5
    %v397 = vmul.f32 %v357, 0.5
    %v398 = vmul.f32 %v358, 0.5
    %v399 = vmul.f32 %v359, 0.5
    %v400 = vmul.f32 %v360, 0.5
    %v401 = vmul.f32 %v361, 0.5
    %v402 = vmul.f32 %v362, 0.5
    %v403 = vmul.f32 %v363, 0.5
    %v404 = vmul.f32 %v364, 0.5
    %v405 = vmul.f32 %v365, 0.5
    %v406 = vmul.f32 %v366, 0.5
    %v407 = vmul.f32 %v367, 0.5
    %v408 = vmul.f32 %v368, 0.5
    %v409 = vmul.f32 %v369, 0.5
    %v410 = vmul.f32 %v370, 0.5
    %v411 = vmul.f32 %v371, 0.5
    %v412 = vmul.f32 %v372, 0.5
    %v413 = vmul.f32 %v373, 0.5
    %v414 = vmul.f32 %v374, 0.5
    %v415 = vmul.f32 %v375, 0.5
    %vm440 = vcmask 1046528
    %v441 = vrot.slane %v392, 1
    %v442 = vrot.slane %v393, 1
    %v443 = vsel %vm440, %v441, %v442
    %v444 = vrot.slane %v394, 1
    %v445 = vsel %vm440, %v442, %v444
    %v446 = vrot.slane %v395, 1
    %v447 = vrot.slane %v396, 1
    %v448 = vsel %vm440, %v446, %v447
    %v449 = vrot.slane %v397, 1
    %v450 = vsel %vm440, %v447, %v449
    %v451 = vrot.slane %v398, 1
    %v452 = vrot.slane %v399, 1
    %v453 = vsel %vm440, %v451, %v452
    %v454 = vrot.slane %v400, 1
    %v455 = vsel %vm440, %v452, %v454
    %v456 = vrot.slane %v401, 1
    %v457 = vrot.slane %v402, 1
    %v458 = vsel %vm440, %v456, %v457
    %v459 = vrot.slane %v403, 1
    %v460 = vsel %vm440, %v457, %v459
    %v461 = vrot.slane %v404, 1
    %v462 = vrot.slane %v405, 1
    %v463 = vsel %vm440, %v461, %v462
    %v464 = vrot.slane %v406, 1
    %v465 = vsel %vm440, %v462, %v464
    %v466 = vrot.slane %v407, 1
    %v467 = vrot.slane %v408, 1
    %v468 = vsel %vm440, %v466, %v467
    %v469 = vrot.slane %v409, 1
    %v470 = vsel %vm440, %v467, %v469
    %v471 = vrot.slane %v410, 1
    %v472 = vrot.slane %v411, 1
    %v473 = vsel %vm440, %v471, %v472
    %v474 = vrot.slane %v412, 1
    %v475 = vsel %vm440, %v472, %v474
    %v476 = vrot.slane %v413, 1
    %v477 = vrot.slane %v414, 1
    %v478 = vsel %vm440, %v476, %v477
    %v479 = vrot.slane %v415, 1
    %v480 = vsel %vm440, %v477, %v479
    %v497 = vadd.f32 %v376, %v443
    %v498 = vadd.f32 %v377, %v445
    %v499 = vadd.f32 %v378, %v448
    %v500 = vadd.f32 %v379, %v450
    %v501 = vadd.f32 %v380, %v453
    %v502 = vadd.f32 %v381, %v455
    %v503 = vadd.f32 %v382, %v458
    %v504 = vadd.f32 %v383, %v460
    %v505 = vadd.f32 %v384, %v463
    %v506 = vadd.f32 %v385, %v465
    %v507 = vadd.f32 %v386, %v468
    %v508 = vadd.f32 %v387, %v470
    %v509 = vadd.f32 %v388, %v473
    %v510 = vadd.f32 %v389, %v475
    %v511 = vadd.f32 %v390, %v478
    %v512 = vadd.f32 %v391, %v480
    %v513 = vmul.f32 %v354, 0.25
    %v514 = vmul.f32 %v357, 0.25
    %v515 = vmul.f32 %v360, 0.25
    %v516 = vmul.f32 %v363, 0.25
    %v517 = vmul.f32 %v366, 0.25
    %v518 = vmul.f32 %v369, 0.25
    %v519 = vmul.f32 %v372, 0.25
    %v520 = vmul.f32 %v375, 0.25
    %vm545 = vcmask 1045504
    %v546 = vrot.slane %v376, 2
    %v547 = vrot.slane %v377, 2
    %v548 = vsel %vm545, %v546, %v547
    %v549 = vrot.slane %v513, 2
    %v550 = vsel %vm545, %v547, %v549
    %v551 = vrot.slane %v378, 2
    %v552 = vrot.slane %v379, 2
    %v553 = vsel %vm545, %v551, %v552
    %v554 = vrot.slane %v514, 2
    %v555 = vsel %vm545, %v552, %v554
    %v556 = vrot.slane %v380, 2
    %v557 = vrot.slane %v381, 2
    %v558 = vsel %vm545, %v556, %v557
    %v559 = vrot.slane %v515, 2
    %v560 = vsel %vm545, %v557, %v559
    %v561 = vrot.slane %v382, 2
    %v562 = vrot.slane %v383, 2
    %v563 = vsel %vm545, %v561, %v562
    %v564 = vrot.slane %v516, 2
    %v565 = vsel %vm545, %v562, %v564
    %v566 = vrot.slane %v384, 2
    %v567 = vrot.slane %v385, 2
    %v568 = vsel %vm545, %v566, %v567
    %v569 = vrot.slane %v517, 2
    %v570 = vsel %vm545, %v567, %v569
    %v571 = vrot.slane %v386, 2
    %v572 = vrot.slane %v387, 2
    %v573 = vsel %vm545, %v571, %v572
    %v574 = vrot.slane %v518, 2
    %v575 = vsel %vm545, %v572, %v574
    %v576 = vrot.slane %v388, 2
    %v577 = vrot.slane %v389, 2
    %v578 = vsel %vm545, %v576, %v577
    %v579 = vrot.slane %v519, 2
    %v580 = vsel %vm545, %v577, %v579
    %v581 = vrot.slane %v390, 2
    %v582 = vrot.slane %v391, 2
    %v583 = vsel %vm545, %v581, %v582
    %v584 = vrot.slane %v520, 2
    %v585 = vsel %vm545, %v582, %v584
    %v602 = vadd.f32 %v497, %v548
    %v603 = vadd.f32 %v498, %v550
    %v604 = vadd.f32 %v499, %v553
    %v605 = vadd.f32 %v500, %v555
    %v606 = vadd.f32 %v501, %v558
    %v607 = vadd.f32 %v502, %v560
    %v608 = vadd.f32 %v503, %v563
    %v609 = vadd.f32 %v504, %v565
    %v610 = vadd.f32 %v505, %v568
    %v611 = vadd.f32 %v506, %v570
    %v612 = vadd.f32 %v507, %v573
    %v613 = vadd.f32 %v508, %v575
    %v614 = vadd.f32 %v509, %v578
    %v615 = vadd.f32 %v510, %v580
    %v616 = vadd.f32 %v511, %v583
    %v617 = vadd.f32 %v512, %v585
    %vm618 = vcmask 64512
    %619 = vst.msk [vmem:[#allocation5] sm:$0xff] %vm618, %v602
    %620 = vst.msk [vmem:[#allocation5 + $0x8] sm:$0xff] %vm618, %v603
    %621 = vst.msk [vmem:[#allocation5 + $0x10] sm:$0xff] %vm618, %v604
    %622 = vst.msk [vmem:[#allocation5 + $0x18] sm:$0xff] %vm618, %v605
    %623 = vst.msk [vmem:[#allocation5 + $0x20] sm:$0xff] %vm618, %v606
    %624 = vst.msk [vmem:[#allocation5 + $0x28] sm:$0xff] %vm618, %v607
    %625 = vst.msk [vmem:[#allocation5 + $0x30] sm:$0xff] %vm618, %v608
    %626 = vst.msk [vmem:[#allocation5 + $0x38] sm:$0xff] %vm618, %v609
    %627 = vst.msk [vmem:[#allocation5 + $0x40] sm:$0xff] %vm618, %v610
    %628 = vst.msk [vmem:[#allocation5 + $0x48] sm:$0xff] %vm618, %v611
    %629 = vst.msk [vmem:[#allocation5 + $0x50] sm:$0xff] %vm618, %v612
    %630 = vst.msk [vmem:[#allocation5 + $0x58] sm:$0xff] %vm618, %v613
    %631 = vst.msk [vmem:[#allocation5 + $0x60] sm:$0xff] %vm618, %v614
    %632 = vst.msk [vmem:[#allocation5 + $0x68] sm:$0xff] %vm618, %v615
    %633 = vst.msk [vmem:[#allocation5 + $0x70] sm:$0xff] %vm618, %v616
    %634 = vst.msk [vmem:[#allocation5 + $0x78] sm:$0xff] %vm618, %v617
    // Predicated region
    $region10: #{tpu_custom_call.1} parent=1 // pred_check
      _
    $region11: #{tpu_custom_call.1} parent=1 // pred_check_branch
      %636 = sbr.rel (0) target = $region13
    $region12: #{tpu_custom_call.1} parent=1 // pred_region
      %s638 = ssub.s32 2048, 2048
      %639 = vsyncadd [#allocation4], %s638
      %s640 = sshll.u32 [#allocation5], 4
      %s641 = int_to_ptr.vmem [resolvable:$true] %s640
      %646 = dma.vmem_to_hbm [thread:$0]  %s641, 2048, %s1, [#allocation4], 128, 128, 8
    $region13: #{tpu_custom_call.1} parent=1 // pred_fallthru
      _
    // Predicated region
    $region14: #{tpu_custom_call.1} parent=1 // pred_check
      _
    $region15: #{tpu_custom_call.1} parent=1 // pred_check_branch
      %648 = sbr.rel (0) target = $region17
    $region16: #{tpu_custom_call.1} parent=1 // pred_region
      %649 = dma.done [#allocation4], 2048
    $region17: #{tpu_custom_call.1} parent=1 // pred_fallthru
      _
    %650 = vsyncpa [#allocation3], 1
    %651 = vsyncpa [#allocation4], 1

</llo_original>
